<compile_context>
chip_gen: v6e
topology: v6e:2x2x1
jax: 0.10.0
libtpu: 0.0.40
codegen_flags: <defaults>
</compile_context>

<pallas_src>
import jax
import jax.numpy as jnp
from jax.experimental import pallas as pl
from jax.experimental.pallas import tpu as pltpu

_LANES = 128  # vreg lane width (last dim)

# Conservative defaults (safe on every generation, incl. v7x's 64 MiB VMEM).
_DEFAULT_BLOCK_ROWS = 8192            # 8192 * 128 * 4 B = 4 MiB per f32 buffer
_DEFAULT_VMEM_LIMIT = 40 * 1024 * 1024


def _pick_block_rows():
    """Generation-aware (block_rows, vmem_limit_bytes) for the streaming grid."""
    try:
        info = pltpu.get_tpu_info()
        vmem_bytes = getattr(info, "vmem_capacity_bytes", None)
        if vmem_bytes is not None and vmem_bytes >= 96 * 1024 * 1024:
            # v5e / v6e: 128 MiB VMEM -> 8 MiB blocks (2 arrays x 2 bufs = 32 MiB).
            return 16384, 64 * 1024 * 1024
    except Exception:
        pass
    # v7x (64 MiB VMEM) or unknown: 4 MiB blocks, <= 40 MiB scoped VMEM.
    return _DEFAULT_BLOCK_ROWS, _DEFAULT_VMEM_LIMIT


def _linreg_kernel(w_ref, b_ref, x_ref, o_ref):
    # Scalars from SMEM; one fused elementwise affine on the whole VMEM tile.
    # Compute in f32, cast at the store (identity for f32 inputs).
    w = w_ref[0]
    b = b_ref[0]
    o_ref[...] = (w * x_ref[...].astype(jnp.float32) + b).astype(o_ref.dtype)


def _run_kernel(x_flat: jax.Array, w_f32: jax.Array, b_f32: jax.Array) -> jax.Array:
    """Kernel over a 128-aligned flat array (n % 128 == 0). Zero extra copies."""
    n = x_flat.shape[0]
    dtype = x_flat.dtype
    rows = n // _LANES

    block_rows, vmem_limit = _pick_block_rows()
    block_rows = min(block_rows, rows)  # single block == full array dims is legal

    # Contiguous row-major reshape: free layout change, no data movement.
    x2d = x_flat.reshape(rows, _LANES)
    grid = (pl.cdiv(rows, block_rows),)  # partial last block handled by Pallas

    itemsize = jnp.dtype(dtype).itemsize

    out = pl.pallas_call(
        _linreg_kernel,
        out_shape=jax.ShapeDtypeStruct((rows, _LANES), dtype),
        grid=grid,
        in_specs=[
            pl.BlockSpec(memory_space=pltpu.SMEM),                 # w scalar (resident)
            pl.BlockSpec(memory_space=pltpu.SMEM),                 # b scalar (resident)
            pl.BlockSpec((block_rows, _LANES), lambda i: (i, 0)),  # x row-block
        ],
        out_specs=pl.BlockSpec((block_rows, _LANES), lambda i: (i, 0)),
        compiler_params=pltpu.CompilerParams(
            # TODO(synk): verify in a trace that v7x shards this axis across both
            # TensorCores; if not, switch to pltpu.CORE_PARALLEL / pl.core_map.
            dimension_semantics=("parallel",),
            vmem_limit_bytes=vmem_limit,
        ),
        cost_estimate=pl.CostEstimate(
            flops=2 * n, transcendentals=0, bytes_accessed=2 * n * itemsize),
        # Optional (per review): input_output_aliases={2: 0} if the caller donates x;
        # pipeline_mode=pl.Buffered(3) on x only if a trace shows exposed input DMA.
    )(w_f32, b_f32, x2d)

    return out.reshape(n)


def linear_regression(x: jax.Array, w: jax.Array, b: jax.Array) -> jax.Array:
    """y = w * x + b with scalar w, b (shape (1,)) — matches the torch module."""
    assert x.ndim == 1
    n = x.shape[0]
    dtype = x.dtype

    if n == 0:
        return x

    w_f32 = jnp.asarray(w, jnp.float32).reshape(1)
    b_f32 = jnp.asarray(b, jnp.float32).reshape(1)

    n_main = (n // _LANES) * _LANES  # 128-aligned prefix
    tail = n - n_main

    if tail == 0:
        # Aligned: zero-extra-copy path (reshape in, reshape out).
        return _run_kernel(x, w_f32, b_f32)

    if n_main == 0:
        # Tiny input (< 128 elements, e.g. the module's 50-element toy input):
        # pad to one (1, 128) tile — negligible cost at this size.
        x_pad = jnp.pad(x, (0, _LANES - n))
        y = _run_kernel(x_pad, w_f32, b_f32)
        return y[:n]

    # Large ragged: kernel on the aligned prefix, plain jnp affine on the <=127
    # element tail, stitch only the tail (avoids whole-array pad + output slice).
    y_main = _run_kernel(x[:n_main], w_f32, b_f32)
    y_tail = (w_f32[0] * x[n_main:].astype(jnp.float32) + b_f32[0]).astype(dtype)
    return jnp.concatenate([y_main, y_tail])


if __name__ == "__main__":
    key = jax.random.PRNGKey(0)
    kw, kb = jax.random.split(key)

    # Deterministic parameter init (stand-in for torch.randn(1)).
    weights = jax.random.normal(kw, (1,), dtype=jnp.float32)
    bias = jax.random.normal(kb, (1,), dtype=jnp.float32)

    # 1) x = torch.arange(0, 1, 0.02) -> 50 elements (the module's toy input).
    x = jnp.arange(0.0, 1.0, 0.02, dtype=jnp.float32)
    y = jax.block_until_ready(linear_regression(x, weights, bias))
    y_ref = weights[0] * x + bias[0]
    assert y.shape == x.shape
    assert jnp.allclose(y, y_ref, rtol=1e-6, atol=1e-6)

    # 2) Aligned size exercising the zero-copy multi-block path (+ partial last block).
    kx = jax.random.PRNGKey(1)
    n_big = (16384 + 8) * 128
    x_big = jax.random.normal(kx, (n_big,), dtype=jnp.float32)
    y_big = jax.block_until_ready(linear_regression(x_big, weights, bias))
    y_big_ref = weights[0] * x_big + bias[0]
    assert y_big.shape == x_big.shape
    assert jnp.allclose(y_big, y_big_ref, rtol=1e-6, atol=1e-6)

    # 3) Ragged size exercising the prefix-kernel + tail-stitch path.
    kx2 = jax.random.PRNGKey(2)
    x_rag = jax.random.normal(kx2, (1000 * 128 + 77,), dtype=jnp.float32)
    y_rag = jax.block_until_ready(linear_regression(x_rag, weights, bias))
    y_rag_ref = weights[0] * x_rag + bias[0]
    assert y_rag.shape == x_rag.shape
    assert jnp.allclose(y_rag, y_rag_ref, rtol=1e-6, atol=1e-6)

    print("KERNEL_OK")
</pallas_src>

<mosaic_0001>
module attributes {stable_mosaic.version = 11 : i64} {
  func.func @_linreg_kernel(%arg0: i32, %arg1: memref<1xf32, #tpu.memory_space<smem>>, %arg2: memref<1xf32, #tpu.memory_space<smem>>, %arg3: memref<1x128xf32, #tpu.memory_space<vmem>>, %arg4: memref<1x128xf32, #tpu.memory_space<vmem>>) attributes {dimension_semantics = [#tpu.dimension_semantics<parallel>], iteration_bounds = array<i64: 1>, scalar_prefetch = 0 : i64, scratch_operands = 0 : i64, tpu.core_type = #tpu.core_type<tc>, window_params = [{transform_indices = @transform_0, window_bounds = array<i64: 1>}, {transform_indices = @transform_1, window_bounds = array<i64: 1>}, {transform_indices = @transform_2, window_bounds = array<i64: 1, 128>}, {transform_indices = @transform_3, window_bounds = array<i64: 1, 128>}]} {
    %c0 = arith.constant 0 : index
    %0 = memref.load %arg1[%c0] : memref<1xf32, #tpu.memory_space<smem>>
    %c0_0 = arith.constant 0 : index
    %1 = memref.load %arg2[%c0_0] : memref<1xf32, #tpu.memory_space<smem>>
    %c0_1 = arith.constant 0 : index
    %c0_2 = arith.constant 0 : index
    %2 = vector.load %arg3[%c0_1, %c0_2] : memref<1x128xf32, #tpu.memory_space<vmem>>, vector<1x128xf32>
    %3 = vector.broadcast %0 : f32 to vector<1x128xf32>
    %4 = arith.mulf %3, %2 : vector<1x128xf32>
    %5 = vector.broadcast %1 : f32 to vector<1x128xf32>
    %6 = arith.addf %4, %5 : vector<1x128xf32>
    %c0_3 = arith.constant 0 : index
    %c0_4 = arith.constant 0 : index
    %7 = vector.load %arg4[%c0_3, %c0_4] : memref<1x128xf32, #tpu.memory_space<vmem>>, vector<1x128xf32>
    tpu.vector_store %arg4[%c0_3, %c0_4], %6 {strides = array<i32>} : memref<1x128xf32, #tpu.memory_space<vmem>>, vector<1x128xf32>,
    return
  }
  func.func @transform_0(%arg0: i32) -> i32 {
    %c0_i32 = arith.constant 0 : i32
    %c0_i32_0 = arith.constant 0 : i32
    return %c0_i32 : i32
  }
  func.func @transform_1(%arg0: i32) -> i32 {
    %c0_i32 = arith.constant 0 : i32
    %c0_i32_0 = arith.constant 0 : i32
    return %c0_i32 : i32
  }
  func.func @transform_2(%arg0: i32) -> (i32, i32) {
    %c0_i32 = arith.constant 0 : i32
    %c0_i32_0 = arith.constant 0 : i32
    return %arg0, %c0_i32 : i32, i32
  }
  func.func @transform_3(%arg0: i32) -> (i32, i32) {
    %c0_i32 = arith.constant 0 : i32
    %c0_i32_0 = arith.constant 0 : i32
    return %arg0, %c0_i32 : i32, i32
  }
}

</mosaic_0001>

<llo_original>
// kernel: tpu_custom_call.1
$region0: #{tpu_custom_call.1}
  #allocation0 [shape = 'u32[]', space=smem, size = 0x4, offset = 0x4, fixed_abs, tag = 'smem constant byte address 0x4 - core index']
  #allocation1 [shape = 'u32[144,128]{1,0:T(1,128)}', space=vmem, size = 0x12000, scoped, tag = 'internal scratch']
  #allocation2 [shape = 'f32[1]{0:T(128)S(6)}', space=smem, size = 0x200, scoped, tag = 'scoped memory for tpu_custom_call.1']
  #allocation3 [shape = 'f32[1]{0:T(128)S(6)}', space=smem, size = 0x200, scoped, tag = 'scoped memory for tpu_custom_call.1']
  %s0 = inlined_call_operand.<no memory space> [shape: f32[1], index: 0, kind: input, shape index: {}]
  %s1 = inlined_call_operand.<no memory space> [shape: f32[1], index: 1, kind: input, shape index: {}]
  %s2 = inlined_call_operand.vmem [shape: f32[1,128], index: 2, kind: input, shape index: {}]
  %s3 = inlined_call_operand.hbm [shape: f32[1,128], index: 3, kind: output, shape index: {}]
  %s4 = sld [smem:[#allocation0]]
  $region22: #{tpu_custom_call.1} parent=0
    _
  %s6 = ssub.s32 1, %s4
  %s7 = scalar_select 0, %s6, %s4
  %8 = sst [smem:[#allocation2]] %s0
  %9 = sst [smem:[#allocation3]] %s1
  $region1: #{tpu_custom_call.1} parent=0
    #allocation4 [shape = 'u8[512]{0}', space=vmem, size = 0x400, scoped, tag = 'output window, operand 0, single buffered']
    #allocation5 [shape = 's32[1]{0}', space=sflag, size = 0x4, scoped, tag = 'scoped memory for tpu_custom_call.1']
    %10 = vsyncpa [#allocation5], 0
    // Predicated region
    $region2: #{tpu_custom_call.1} parent=1 // pred_check
      _
    $region3: #{tpu_custom_call.1} parent=1 // pred_check_branch
      %12 = sbr.rel (0) target = $region5
    $region4: #{tpu_custom_call.1} parent=1 // pred_region
      _
    $region5: #{tpu_custom_call.1} parent=1 // pred_fallthru
      _
    // Predicated region
    $region6: #{tpu_custom_call.1} parent=1 // pred_check
      _
    $region7: #{tpu_custom_call.1} parent=1 // pred_check_branch
      %14 = sbr.rel (0) target = $region9
    $region8: #{tpu_custom_call.1} parent=1 // pred_region
      _
    $region9: #{tpu_custom_call.1} parent=1 // pred_fallthru
      _
    // Predicated region
    $region10: #{tpu_custom_call.1} parent=1 // pred_check
      _
    $region11: #{tpu_custom_call.1} parent=1 // pred_check_branch
      %16 = sbr.rel (0) target = $region13
    $region12: #{tpu_custom_call.1} parent=1 // pred_region
      _
    $region13: #{tpu_custom_call.1} parent=1 // pred_fallthru
      _
    %s17 = sld [smem:[#allocation2]]
    %s18 = sld [smem:[#allocation3]]
    %v19 = vld [vmem:[%s2] sm:$0x1]
    %v20 = vstv %s17
    %v21 = vmul.f32 %v20, %v19
    %v22 = vstv %s18
    %v23 = vadd.f32 %v21, %v22
    %24 = vst [vmem:[#allocation4] sm:$0x1] %v23
    // Predicated region
    $region14: #{tpu_custom_call.1} parent=1 // pred_check
      _
    $region15: #{tpu_custom_call.1} parent=1 // pred_check_branch
      %26 = sbr.rel (0) target = $region17
    $region16: #{tpu_custom_call.1} parent=1 // pred_region
      %s28 = ssub.s32 16, 16
      %29 = vsyncadd [#allocation5], %s28
      %s31 = sshll.u32 [#allocation4], 4
      %s32 = int_to_ptr.vmem [resolvable:$true] %s31
      %34 = dma.vmem_to_hbm [thread:$0]  %s32, 16, %s3, [#allocation5]
    $region17: #{tpu_custom_call.1} parent=1 // pred_fallthru
      _
    // Predicated region
    $region18: #{tpu_custom_call.1} parent=1 // pred_check
      _
    $region19: #{tpu_custom_call.1} parent=1 // pred_check_branch
      %36 = sbr.rel (0) target = $region21
    $region20: #{tpu_custom_call.1} parent=1 // pred_region
      %37 = dma.done [#allocation5], 16
    $region21: #{tpu_custom_call.1} parent=1 // pred_fallthru
      _
    %38 = vsyncpa [#allocation5], 1

</llo_original>
